<compile_context>
chip_gen: v7x
topology: tpu7x:2x2x1
jax: 0.10.0
libtpu: 0.0.40
codegen_flags: <defaults>
</compile_context>

<pallas_src>
import functools

import jax
import jax.numpy as jnp
from jax import lax
from jax.experimental import pallas as pl
from jax.experimental.pallas import tpu as pltpu


def _round_up(x, m):
    return ((x + m - 1) // m) * m


def _dwsep_kernel(x_ref, wdw_ref, bdw_ref, wpw_ref, bpw_ref, o_ref, xs_ref, *,
                  c_in, c_out, h, w, kh_size, kw_size, pad, dil, left, use_mxu):
    """One grid step == one image.

    x_ref  : (C, H*W)              flat input plane for this image
    wdw_ref: (C, KH*KW)            depthwise weights (resident across steps)
    bdw_ref: (C, 1)                depthwise bias
    wpw_ref: (Cout, C)             pointwise weights
    bpw_ref: (Cout, 1)             pointwise bias
    o_ref  : (Cout, H*W)           flat output plane (lane-dense)
    xs_ref : (C, left + H*W + left) f32 scratch: flat zero-haloed input
    """
    l = h * w

    # ---- build the flat zero-haloed input in VMEM ---------------------------
    if left:
        zeros = jnp.zeros((c_in, left), jnp.float32)
        xs_ref[:, :left] = zeros                        # top/left halo only
        xs_ref[:, left + l:left + l + left] = zeros     # bottom/right halo only
    xs_ref[:, left:left + l] = x_ref[...].astype(jnp.float32)  # 128-aligned

    # ---- per-kw edge masks (lane-only, hoisted out of the tap loops) --------
    w_pos = lax.broadcasted_iota(jnp.int32, (1, l), 1) % w
    col_masks = []
    for kw in range(kw_size):
        dwo = kw * dil - pad
        if dwo < 0:
            col_masks.append(w_pos >= -dwo)
        elif dwo > 0:
            col_masks.append(w_pos < w - dwo)
        else:
            col_masks.append(None)                      # tap never crosses edge

    # ---- depthwise conv: one load per kh, kw taps via XLU lane rolls --------
    wdw = wdw_ref[...].astype(jnp.float32)              # (C, KH*KW)
    acc = jnp.zeros((c_in, l), jnp.float32)
    for kh in range(kh_size):
        dh = kh * dil - pad
        base = left + dh * w                            # static int, >= 0
        center = xs_ref[:, base:base + l]               # single (C, H*W) load
        for kw in range(kw_size):
            dwo = kw * dil - pad
            t = kh * kw_size + kw
            if dwo == 0:
                patch = center
            else:
                # Lane rotate on the XLU; the cyclically wrapped lanes are
                # exactly the columns the edge mask below zeros.
                patch = pltpu.roll(center, (-dwo) % l, 1)
            m = col_masks[kw]
            if m is not None:
                patch = jnp.where(m, patch, 0.0)
            acc = acc + patch * wdw[:, t:t + 1]         # per-channel weight
    dw_act = jnp.maximum(acc + bdw_ref[...].astype(jnp.float32), 0.0)

    # ---- pointwise 1x1 conv + bias + ReLU ------------------------------------
    wpw = wpw_ref[...].astype(jnp.float32)              # (Cout, C)
    bpw = bpw_ref[...].astype(jnp.float32)              # (Cout, 1)
    if use_mxu:
        # f32 / HIGHEST precision so numerics match the f32 reference.
        pw = jnp.dot(wpw, dw_act, preferred_element_type=jnp.float32,
                     precision=lax.Precision.HIGHEST)
    else:
        # Tiny C/Cout: unrolled VPU broadcast MACs beat an MXU push/drain.
        pw = jnp.zeros((c_out, l), jnp.float32)
        for c in range(c_in):
            pw = pw + wpw[:, c:c + 1] * dw_act[c:c + 1, :]
    o_ref[...] = jnp.maximum(pw + bpw, 0.0).astype(o_ref.dtype)


def depthwise_separable_conv(x_nchw, w_dw, b_dw, w_pw, b_pw, *,
                             stride=1, padding=0, dilation=1):
    """Forward pass of DepthwiseSeparableConvModule (norm_cfg=None, act=ReLU).

    x_nchw: (N, C, H, W)      w_dw: (C, 1, KH, KW)   b_dw: (C,)
    w_pw:   (Cout, C, 1, 1)   b_pw: (Cout,)
    returns (N, Cout, H, W)
    """
    n, c, h, w = (int(s) for s in x_nchw.shape)
    kh, kw = int(w_dw.shape[2]), int(w_dw.shape[3])
    cout = int(w_pw.shape[0])
    h_out = (h + 2 * padding - dilation * (kh - 1) - 1) // stride + 1
    w_out = (w + 2 * padding - dilation * (kw - 1) - 1) // stride + 1
    if stride != 1 or (h_out, w_out) != (h, w):
        # TODO(synk): non-unit stride / non-"same" padding needs a strided
        # window path; not implemented in this flat lane-dense kernel.
        raise NotImplementedError("flat kernel supports stride=1 'same' convs")
    assert padding < w, "edge-mask / halo derivation assumes padding < W"

    l = h * w
    halo = padding * w                       # vertical reach of the taps
    left = _round_up(halo, 128) if halo else 0
    lp = 2 * left + l if left else l

    x3 = x_nchw.reshape(n, c, l)                        # free reshape
    wdw2 = w_dw.reshape(c, kh * kw)                     # free reshape
    bdw2 = b_dw.reshape(c, 1)
    wpw2 = w_pw.reshape(cout, c)                        # free reshape
    bpw2 = b_pw.reshape(cout, 1)

    # MXU only pays when both the contraction (C) and the output rows (Cout)
    # cover a decent fraction of the systolic array; below that the unrolled
    # VPU broadcast-MAC path wins (no weight push / result drain).
    use_mxu = (c >= 64) and (cout >= 32)

    isz = jnp.dtype(x_nchw.dtype).itemsize
    weight_bytes = 4 * (c * (kh * kw + 1) + cout * (c + 1))
    need = (2 * c * l * isz                 # double-buffered input blocks
            + 2 * cout * l * isz            # double-buffered output blocks
            + 4 * c * lp                    # f32 haloed scratch
            + 2 * weight_bytes)
    vmem_limit = int(min(max(2 * need + (4 << 20), 16 << 20), 48 << 20))

    cost = pl.CostEstimate(
        flops=2 * n * c * l * kh * kw + 2 * n * cout * c * l,
        transcendentals=0,
        bytes_accessed=n * c * l * isz + n * cout * l * isz + weight_bytes)

    kernel = functools.partial(
        _dwsep_kernel, c_in=c, c_out=cout, h=h, w=w,
        kh_size=kh, kw_size=kw, pad=padding, dil=dilation,
        left=left, use_mxu=use_mxu)

    out3 = pl.pallas_call(
        kernel,
        out_shape=jax.ShapeDtypeStruct((n, cout, l), x_nchw.dtype),
        grid_spec=pltpu.PrefetchScalarGridSpec(
            num_scalar_prefetch=0,
            grid=(n,),                       # one image per step, pipelined
            in_specs=[
                pl.BlockSpec((None, c, l), lambda i: (i, 0, 0)),
                pl.BlockSpec((c, kh * kw), lambda i: (0, 0)),   # resident
                pl.BlockSpec((c, 1), lambda i: (0, 0)),         # resident
                pl.BlockSpec((cout, c), lambda i: (0, 0)),      # resident
                pl.BlockSpec((cout, 1), lambda i: (0, 0)),      # resident
            ],
            out_specs=pl.BlockSpec((None, cout, l), lambda i: (i, 0, 0)),
            scratch_shapes=[pltpu.VMEM((c, lp), jnp.float32)],
        ),
        compiler_params=pltpu.CompilerParams(
            dimension_semantics=("parallel",),
            vmem_limit_bytes=vmem_limit),
        cost_estimate=cost,
    )(x3, wdw2, bdw2, wpw2, bpw2)

    return out3.reshape(n, cout, h, w)                  # free reshape


def _reference(x, w_dw, b_dw, w_pw, b_pw, *, stride, padding, dilation):
    """Pure-JAX reference mirroring the PyTorch module semantics."""
    dw = jax.lax.conv_general_dilated(
        x, w_dw, (stride, stride), [(padding, padding)] * 2,
        rhs_dilation=(dilation, dilation), feature_group_count=x.shape[1],
        dimension_numbers=("NCHW", "OIHW", "NCHW"))
    dw = jax.nn.relu(dw + b_dw[None, :, None, None])
    pw = jax.lax.conv_general_dilated(
        dw, w_pw, (1, 1), [(0, 0)] * 2,
        dimension_numbers=("NCHW", "OIHW", "NCHW"))
    return jax.nn.relu(pw + b_pw[None, :, None, None])


if __name__ == "__main__":
    # Module config: in_channels=4, out_channels=8, kernel_size=3, stride=1,
    # padding=1, dilation=1, norm_cfg=None (so bias=True), act=ReLU.
    N, C, H, W = 2, 4, 16, 16
    COUT, KH, KW = 8, 3, 3
    STRIDE, PAD, DIL = 1, 1, 1

    key = jax.random.PRNGKey(0)
    k_x, k_dw, k_pw = jax.random.split(key, 3)

    x = jax.random.normal(k_x, (N, C, H, W), dtype=jnp.float32)

    # kaiming_normal_(fan_out, relu): std = sqrt(2 / fan_out)
    fan_out_dw = (C // C) * KH * KW            # out_ch * kh * kw / groups = 9
    w_dw = jax.random.normal(k_dw, (C, 1, KH, KW), jnp.float32) * jnp.sqrt(2.0 / fan_out_dw)
    b_dw = jnp.zeros((C,), jnp.float32)        # constant bias init = 0

    fan_out_pw = COUT * 1 * 1
    w_pw = jax.random.normal(k_pw, (COUT, C, 1, 1), jnp.float32) * jnp.sqrt(2.0 / fan_out_pw)
    b_pw = jnp.zeros((COUT,), jnp.float32)

    out = depthwise_separable_conv(x, w_dw, b_dw, w_pw, b_pw,
                                   stride=STRIDE, padding=PAD, dilation=DIL)
    out = jax.block_until_ready(out)

    ref = _reference(x, w_dw, b_dw, w_pw, b_pw,
                     stride=STRIDE, padding=PAD, dilation=DIL)
    assert out.shape == (N, COUT, H, W), out.shape
    assert jnp.allclose(out, ref, rtol=1e-4, atol=1e-5), float(jnp.max(jnp.abs(out - ref)))

    print("KERNEL_OK")
</pallas_src>

<mosaic_0001>
module attributes {stable_mosaic.version = 11 : i64} {
  func.func @_dwsep_kernel(%arg0: i32, %arg1: memref<1x4x256xf32, #tpu.memory_space<vmem>>, %arg2: memref<4x9xf32, #tpu.memory_space<vmem>>, %arg3: memref<4x1xf32, #tpu.memory_space<vmem>>, %arg4: memref<8x4xf32, #tpu.memory_space<vmem>>, %arg5: memref<8x1xf32, #tpu.memory_space<vmem>>, %arg6: memref<1x8x256xf32, #tpu.memory_space<vmem>>, %arg7: memref<4x512xf32, #tpu.memory_space<vmem>>) attributes {dimension_semantics = [#tpu.dimension_semantics<parallel>], iteration_bounds = array<i64: 2>, scalar_prefetch = 0 : i64, scratch_operands = 1 : i64, tpu.core_type = #tpu.core_type<tc>, window_params = [{transform_indices = @transform_0, window_bounds = array<i64: 1, 4, 256>}, {pipeline_mode = #tpu.pipeline_mode<synchronous>, transform_indices = @transform_1, window_bounds = array<i64: 4, 9>}, {pipeline_mode = #tpu.pipeline_mode<synchronous>, transform_indices = @transform_2, window_bounds = array<i64: 4, 1>}, {pipeline_mode = #tpu.pipeline_mode<synchronous>, transform_indices = @transform_3, window_bounds = array<i64: 8, 4>}, {pipeline_mode = #tpu.pipeline_mode<synchronous>, transform_indices = @transform_4, window_bounds = array<i64: 8, 1>}, {transform_indices = @transform_5, window_bounds = array<i64: 1, 8, 256>}]} {
    %cst = arith.constant 0.000000e+00 : f32
    %0 = vector.broadcast %cst : f32 to vector<4x128xf32>
    %c0 = arith.constant 0 : index
    %c0_0 = arith.constant 0 : index
    %1 = vector.load %arg7[%c0, %c0_0] : memref<4x512xf32, #tpu.memory_space<vmem>>, vector<4x128xf32>
    tpu.vector_store %arg7[%c0, %c0_0], %0 {strides = array<i32>} : memref<4x512xf32, #tpu.memory_space<vmem>>, vector<4x128xf32>,
    %c0_1 = arith.constant 0 : index
    %c384 = arith.constant 384 : index
    %2 = vector.load %arg7[%c0_1, %c384] : memref<4x512xf32, #tpu.memory_space<vmem>>, vector<4x128xf32>
    tpu.vector_store %arg7[%c0_1, %c384], %0 {strides = array<i32>} : memref<4x512xf32, #tpu.memory_space<vmem>>, vector<4x128xf32>,
    %c0_2 = arith.constant 0 : index
    %c0_3 = arith.constant 0 : index
    %c0_4 = arith.constant 0 : index
    %3 = vector.load %arg1[%c0_2, %c0_3, %c0_4] : memref<1x4x256xf32, #tpu.memory_space<vmem>>, vector<1x4x256xf32>
    %4 = vector.shape_cast %3 : vector<1x4x256xf32> to vector<4x256xf32>
    %c0_5 = arith.constant 0 : index
    %c128 = arith.constant 128 : index
    %5 = vector.load %arg7[%c0_5, %c128] : memref<4x512xf32, #tpu.memory_space<vmem>>, vector<4x256xf32>
    tpu.vector_store %arg7[%c0_5, %c128], %4 {strides = array<i32>} : memref<4x512xf32, #tpu.memory_space<vmem>>, vector<4x256xf32>,
    %6 = tpu.iota {dimensions = array<i32: 1>} : vector<1x256xi32>
    %c16_i32 = arith.constant 16 : i32
    %c0_i32 = arith.constant 0 : i32
    %7 = arith.cmpi eq, %c16_i32, %c0_i32 : i32
    %c1_i32 = arith.constant 1 : i32
    %8 = arith.select %7, %c1_i32, %c16_i32 : i32
    %9 = vector.broadcast %8 : i32 to vector<1x256xi32>
    %10 = arith.remsi %6, %9 : vector<1x256xi32>
    %c0_i32_6 = arith.constant 0 : i32
    %11 = vector.broadcast %c0_i32_6 : i32 to vector<1x256xi32>
    %12 = arith.cmpi ne, %10, %11 : vector<1x256xi32>
    %c0_i32_7 = arith.constant 0 : i32
    %13 = vector.broadcast %c0_i32_7 : i32 to vector<1x256xi32>
    %14 = arith.cmpi slt, %10, %13 : vector<1x256xi32>
    %c0_i32_8 = arith.constant 0 : i32
    %15 = arith.cmpi slt, %8, %c0_i32_8 : i32
    %16 = vector.broadcast %15 : i1 to vector<1x256xi1>
    %17 = vector.broadcast %16 : vector<1x256xi1> to vector<1x256xi1>
    %18 = arith.xori %14, %17 : vector<1x256xi1>
    %19 = arith.andi %18, %12 : vector<1x256xi1>
    %20 = vector.broadcast %8 : i32 to vector<1x256xi32>
    %21 = arith.addi %10, %20 : vector<1x256xi32>
    %22 = arith.select %19, %21, %10 : vector<1x256xi1>, vector<1x256xi32>
    %c1_i32_9 = arith.constant 1 : i32
    %23 = vector.broadcast %c1_i32_9 : i32 to vector<1x256xi32>
    %24 = arith.cmpi sge, %22, %23 : vector<1x256xi32>
    %c15_i32 = arith.constant 15 : i32
    %25 = vector.broadcast %c15_i32 : i32 to vector<1x256xi32>
    %26 = arith.cmpi slt, %22, %25 : vector<1x256xi32>
    %c0_10 = arith.constant 0 : index
    %c0_11 = arith.constant 0 : index
    %27 = vector.load %arg2[%c0_10, %c0_11] : memref<4x9xf32, #tpu.memory_space<vmem>>, vector<4x9xf32>
    %cst_12 = arith.constant 0.000000e+00 : f32
    %28 = vector.broadcast %cst_12 : f32 to vector<4x256xf32>
    %c0_13 = arith.constant 0 : index
    %c112 = arith.constant 112 : index
    %29 = vector.load %arg7[%c0_13, %c112] : memref<4x512xf32, #tpu.memory_space<vmem>>, vector<4x256xf32>
    %c1_i32_14 = arith.constant 1 : i32
    %30 = tpu.dynamic_rotate %29 by %c1_i32_14 dim 1 : vector<4x256xf32>, i32 -> vector<4x256xf32>
    %cst_15 = arith.constant 0.000000e+00 : f32
    %31 = vector.shape_cast %24 : vector<1x256xi1> to vector<1x256xi1>
    %32 = vector.broadcast %31 : vector<1x256xi1> to vector<4x256xi1>
    %33 = vector.broadcast %cst_15 : f32 to vector<4x256xf32>
    %34 = arith.select %32, %30, %33 : vector<4x256xi1>, vector<4x256xf32>
    %35 = vector.extract_strided_slice %27 {offsets = [0, 0], sizes = [4, 1], strides = [1, 1]} : vector<4x9xf32> to vector<4x1xf32>
    %36 = vector.broadcast %35 : vector<4x1xf32> to vector<4x256xf32>
    %37 = arith.mulf %34, %36 : vector<4x256xf32>
    %38 = arith.addf %28, %37 : vector<4x256xf32>
    %39 = vector.extract_strided_slice %27 {offsets = [0, 1], sizes = [4, 1], strides = [1, 1]} : vector<4x9xf32> to vector<4x1xf32>
    %40 = vector.broadcast %39 : vector<4x1xf32> to vector<4x256xf32>
    %41 = arith.mulf %29, %40 : vector<4x256xf32>
    %42 = arith.addf %38, %41 : vector<4x256xf32>
    %c255_i32 = arith.constant 255 : i32
    %43 = tpu.dynamic_rotate %29 by %c255_i32 dim 1 : vector<4x256xf32>, i32 -> vector<4x256xf32>
    %cst_16 = arith.constant 0.000000e+00 : f32
    %44 = vector.shape_cast %26 : vector<1x256xi1> to vector<1x256xi1>
    %45 = vector.broadcast %44 : vector<1x256xi1> to vector<4x256xi1>
    %46 = vector.broadcast %cst_16 : f32 to vector<4x256xf32>
    %47 = arith.select %45, %43, %46 : vector<4x256xi1>, vector<4x256xf32>
    %48 = vector.extract_strided_slice %27 {offsets = [0, 2], sizes = [4, 1], strides = [1, 1]} : vector<4x9xf32> to vector<4x1xf32>
    %49 = vector.broadcast %48 : vector<4x1xf32> to vector<4x256xf32>
    %50 = arith.mulf %47, %49 : vector<4x256xf32>
    %51 = arith.addf %42, %50 : vector<4x256xf32>
    %c0_17 = arith.constant 0 : index
    %c128_18 = arith.constant 128 : index
    %52 = vector.load %arg7[%c0_17, %c128_18] : memref<4x512xf32, #tpu.memory_space<vmem>>, vector<4x256xf32>
    %c1_i32_19 = arith.constant 1 : i32
    %53 = tpu.dynamic_rotate %52 by %c1_i32_19 dim 1 : vector<4x256xf32>, i32 -> vector<4x256xf32>
    %cst_20 = arith.constant 0.000000e+00 : f32
    %54 = vector.shape_cast %24 : vector<1x256xi1> to vector<1x256xi1>
    %55 = vector.broadcast %54 : vector<1x256xi1> to vector<4x256xi1>
    %56 = vector.broadcast %cst_20 : f32 to vector<4x256xf32>
    %57 = arith.select %55, %53, %56 : vector<4x256xi1>, vector<4x256xf32>
    %58 = vector.extract_strided_slice %27 {offsets = [0, 3], sizes = [4, 1], strides = [1, 1]} : vector<4x9xf32> to vector<4x1xf32>
    %59 = vector.broadcast %58 : vector<4x1xf32> to vector<4x256xf32>
    %60 = arith.mulf %57, %59 : vector<4x256xf32>
    %61 = arith.addf %51, %60 : vector<4x256xf32>
    %62 = vector.extract_strided_slice %27 {offsets = [0, 4], sizes = [4, 1], strides = [1, 1]} : vector<4x9xf32> to vector<4x1xf32>
    %63 = vector.broadcast %62 : vector<4x1xf32> to vector<4x256xf32>
    %64 = arith.mulf %52, %63 : vector<4x256xf32>
    %65 = arith.addf %61, %64 : vector<4x256xf32>
    %c255_i32_21 = arith.constant 255 : i32
    %66 = tpu.dynamic_rotate %52 by %c255_i32_21 dim 1 : vector<4x256xf32>, i32 -> vector<4x256xf32>
    %cst_22 = arith.constant 0.000000e+00 : f32
    %67 = vector.shape_cast %26 : vector<1x256xi1> to vector<1x256xi1>
    %68 = vector.broadcast %67 : vector<1x256xi1> to vector<4x256xi1>
    %69 = vector.broadcast %cst_22 : f32 to vector<4x256xf32>
    %70 = arith.select %68, %66, %69 : vector<4x256xi1>, vector<4x256xf32>
    %71 = vector.extract_strided_slice %27 {offsets = [0, 5], sizes = [4, 1], strides = [1, 1]} : vector<4x9xf32> to vector<4x1xf32>
    %72 = vector.broadcast %71 : vector<4x1xf32> to vector<4x256xf32>
    %73 = arith.mulf %70, %72 : vector<4x256xf32>
    %74 = arith.addf %65, %73 : vector<4x256xf32>
    %c0_23 = arith.constant 0 : index
    %c144 = arith.constant 144 : index
    %75 = vector.load %arg7[%c0_23, %c144] : memref<4x512xf32, #tpu.memory_space<vmem>>, vector<4x256xf32>
    %c1_i32_24 = arith.constant 1 : i32
    %76 = tpu.dynamic_rotate %75 by %c1_i32_24 dim 1 : vector<4x256xf32>, i32 -> vector<4x256xf32>
    %cst_25 = arith.constant 0.000000e+00 : f32
    %77 = vector.shape_cast %24 : vector<1x256xi1> to vector<1x256xi1>
    %78 = vector.broadcast %77 : vector<1x256xi1> to vector<4x256xi1>
    %79 = vector.broadcast %cst_25 : f32 to vector<4x256xf32>
    %80 = arith.select %78, %76, %79 : vector<4x256xi1>, vector<4x256xf32>
    %81 = vector.extract_strided_slice %27 {offsets = [0, 6], sizes = [4, 1], strides = [1, 1]} : vector<4x9xf32> to vector<4x1xf32>
    %82 = vector.broadcast %81 : vector<4x1xf32> to vector<4x256xf32>
    %83 = arith.mulf %80, %82 : vector<4x256xf32>
    %84 = arith.addf %74, %83 : vector<4x256xf32>
    %85 = vector.extract_strided_slice %27 {offsets = [0, 7], sizes = [4, 1], strides = [1, 1]} : vector<4x9xf32> to vector<4x1xf32>
    %86 = vector.broadcast %85 : vector<4x1xf32> to vector<4x256xf32>
    %87 = arith.mulf %75, %86 : vector<4x256xf32>
    %88 = arith.addf %84, %87 : vector<4x256xf32>
    %c255_i32_26 = arith.constant 255 : i32
    %89 = tpu.dynamic_rotate %75 by %c255_i32_26 dim 1 : vector<4x256xf32>, i32 -> vector<4x256xf32>
    %cst_27 = arith.constant 0.000000e+00 : f32
    %90 = vector.shape_cast %26 : vector<1x256xi1> to vector<1x256xi1>
    %91 = vector.broadcast %90 : vector<1x256xi1> to vector<4x256xi1>
    %92 = vector.broadcast %cst_27 : f32 to vector<4x256xf32>
    %93 = arith.select %91, %89, %92 : vector<4x256xi1>, vector<4x256xf32>
    %94 = vector.extract_strided_slice %27 {offsets = [0, 8], sizes = [4, 1], strides = [1, 1]} : vector<4x9xf32> to vector<4x1xf32>
    %95 = vector.broadcast %94 : vector<4x1xf32> to vector<4x256xf32>
    %96 = arith.mulf %93, %95 : vector<4x256xf32>
    %97 = arith.addf %88, %96 : vector<4x256xf32>
    %c0_28 = arith.constant 0 : index
    %c0_29 = arith.constant 0 : index
    %98 = vector.load %arg3[%c0_28, %c0_29] : memref<4x1xf32, #tpu.memory_space<vmem>>, vector<4x1xf32>
    %99 = vector.broadcast %98 : vector<4x1xf32> to vector<4x256xf32>
    %100 = arith.addf %97, %99 : vector<4x256xf32>
    %cst_30 = arith.constant 0.000000e+00 : f32
    %101 = vector.broadcast %cst_30 : f32 to vector<4x256xf32>
    %102 = arith.maximumf %100, %101 : vector<4x256xf32>
    %c0_31 = arith.constant 0 : index
    %c0_32 = arith.constant 0 : index
    %103 = vector.load %arg4[%c0_31, %c0_32] : memref<8x4xf32, #tpu.memory_space<vmem>>, vector<8x4xf32>
    %c0_33 = arith.constant 0 : index
    %c0_34 = arith.constant 0 : index
    %104 = vector.load %arg5[%c0_33, %c0_34] : memref<8x1xf32, #tpu.memory_space<vmem>>, vector<8x1xf32>
    %cst_35 = arith.constant 0.000000e+00 : f32
    %105 = vector.broadcast %cst_35 : f32 to vector<8x256xf32>
    %106 = vector.extract_strided_slice %103 {offsets = [0, 0], sizes = [8, 1], strides = [1, 1]} : vector<8x4xf32> to vector<8x1xf32>
    %107 = vector.extract_strided_slice %102 {offsets = [0, 0], sizes = [1, 256], strides = [1, 1]} : vector<4x256xf32> to vector<1x256xf32>
    %108 = vector.broadcast %106 : vector<8x1xf32> to vector<8x256xf32>
    %109 = vector.broadcast %107 : vector<1x256xf32> to vector<8x256xf32>
    %110 = arith.mulf %108, %109 : vector<8x256xf32>
    %111 = arith.addf %105, %110 : vector<8x256xf32>
    %112 = vector.extract_strided_slice %103 {offsets = [0, 1], sizes = [8, 1], strides = [1, 1]} : vector<8x4xf32> to vector<8x1xf32>
    %113 = vector.extract_strided_slice %102 {offsets = [1, 0], sizes = [1, 256], strides = [1, 1]} : vector<4x256xf32> to vector<1x256xf32>
    %114 = vector.broadcast %112 : vector<8x1xf32> to vector<8x256xf32>
    %115 = vector.broadcast %113 : vector<1x256xf32> to vector<8x256xf32>
    %116 = arith.mulf %114, %115 : vector<8x256xf32>
    %117 = arith.addf %111, %116 : vector<8x256xf32>
    %118 = vector.extract_strided_slice %103 {offsets = [0, 2], sizes = [8, 1], strides = [1, 1]} : vector<8x4xf32> to vector<8x1xf32>
    %119 = vector.extract_strided_slice %102 {offsets = [2, 0], sizes = [1, 256], strides = [1, 1]} : vector<4x256xf32> to vector<1x256xf32>
    %120 = vector.broadcast %118 : vector<8x1xf32> to vector<8x256xf32>
    %121 = vector.broadcast %119 : vector<1x256xf32> to vector<8x256xf32>
    %122 = arith.mulf %120, %121 : vector<8x256xf32>
    %123 = arith.addf %117, %122 : vector<8x256xf32>
    %124 = vector.extract_strided_slice %103 {offsets = [0, 3], sizes = [8, 1], strides = [1, 1]} : vector<8x4xf32> to vector<8x1xf32>
    %125 = vector.extract_strided_slice %102 {offsets = [3, 0], sizes = [1, 256], strides = [1, 1]} : vector<4x256xf32> to vector<1x256xf32>
    %126 = vector.broadcast %124 : vector<8x1xf32> to vector<8x256xf32>
    %127 = vector.broadcast %125 : vector<1x256xf32> to vector<8x256xf32>
    %128 = arith.mulf %126, %127 : vector<8x256xf32>
    %129 = arith.addf %123, %128 : vector<8x256xf32>
    %130 = vector.broadcast %104 : vector<8x1xf32> to vector<8x256xf32>
    %131 = arith.addf %129, %130 : vector<8x256xf32>
    %cst_36 = arith.constant 0.000000e+00 : f32
    %132 = vector.broadcast %cst_36 : f32 to vector<8x256xf32>
    %133 = arith.maximumf %131, %132 : vector<8x256xf32>
    %c0_37 = arith.constant 0 : index
    %c0_38 = arith.constant 0 : index
    %c0_39 = arith.constant 0 : index
    %134 = vector.load %arg6[%c0_37, %c0_38, %c0_39] : memref<1x8x256xf32, #tpu.memory_space<vmem>>, vector<1x8x256xf32>
    %135 = vector.shape_cast %134 : vector<1x8x256xf32> to vector<8x256xf32>
    %136 = vector.shape_cast %133 : vector<8x256xf32> to vector<1x8x256xf32>
    tpu.vector_store %arg6[%c0_37, %c0_38, %c0_39], %136 {strides = array<i32>} : memref<1x8x256xf32, #tpu.memory_space<vmem>>, vector<1x8x256xf32>,
    return
  }
  func.func @transform_0(%arg0: i32) -> (i32, i32, i32) {
    %c0_i32 = arith.constant 0 : i32
    %c0_i32_0 = arith.constant 0 : i32
    %c0_i32_1 = arith.constant 0 : i32
    return %arg0, %c0_i32, %c0_i32_0 : i32, i32, i32
  }
  func.func @transform_1(%arg0: i32) -> (i32, i32) {
    %c0_i32 = arith.constant 0 : i32
    %c0_i32_0 = arith.constant 0 : i32
    %c0_i32_1 = arith.constant 0 : i32
    return %c0_i32, %c0_i32_0 : i32, i32
  }
  func.func @transform_2(%arg0: i32) -> (i32, i32) {
    %c0_i32 = arith.constant 0 : i32
    %c0_i32_0 = arith.constant 0 : i32
    %c0_i32_1 = arith.constant 0 : i32
    return %c0_i32, %c0_i32_0 : i32, i32
  }
  func.func @transform_3(%arg0: i32) -> (i32, i32) {
    %c0_i32 = arith.constant 0 : i32
    %c0_i32_0 = arith.constant 0 : i32
    %c0_i32_1 = arith.constant 0 : i32
    return %c0_i32, %c0_i32_0 : i32, i32
  }
  func.func @transform_4(%arg0: i32) -> (i32, i32) {
    %c0_i32 = arith.constant 0 : i32
    %c0_i32_0 = arith.constant 0 : i32
    %c0_i32_1 = arith.constant 0 : i32
    return %c0_i32, %c0_i32_0 : i32, i32
  }
  func.func @transform_5(%arg0: i32) -> (i32, i32, i32) {
    %c0_i32 = arith.constant 0 : i32
    %c0_i32_0 = arith.constant 0 : i32
    %c0_i32_1 = arith.constant 0 : i32
    return %arg0, %c0_i32, %c0_i32_0 : i32, i32, i32
  }
}

</mosaic_0001>

<llo_original>
// kernel: tpu_custom_call.1
$region0: #{tpu_custom_call.1}
  #allocation0 [shape = 'u32[]', space=smem, size = 0x4, offset = 0x4, fixed_abs, tag = 'smem constant byte address 0x4 - core index']
  #allocation1 [shape = 'u32[144,128]{1,0:T(1,128)}', space=vmem, size = 0x12000, scoped, tag = 'internal scratch']
  #allocation2 [shape = 'f32[4,512]{1,0:T(4,128)}', space=vmem, size = 0x2000, scoped, tag = 'scratch operand']
  %s0 = inlined_call_operand.vmem [shape: f32[2,4,256], index: 0, kind: input, shape index: {}]
  %s1 = inlined_call_operand.vmem [shape: f32[4,9], index: 1, kind: input, shape index: {}]
  %s2 = inlined_call_operand.vmem [shape: f32[4,1], index: 2, kind: input, shape index: {}]
  %s3 = inlined_call_operand.vmem [shape: f32[8,4], index: 3, kind: input, shape index: {}]
  %s4 = inlined_call_operand.vmem [shape: f32[8,1], index: 4, kind: input, shape index: {}]
  %s5 = inlined_call_operand.hbm [shape: f32[2,8,256], index: 5, kind: output, shape index: {}]
  %s6 = sld [smem:[#allocation0]]
  $region53: #{tpu_custom_call.1} parent=0
    _
  %s8 = ssub.s32 1, %s6
  %s9 = scalar_select 0, %s8, %s6
  $region1: #{tpu_custom_call.1} parent=0
    #allocation3 [shape = 'u8[16384]{0}', space=vmem, size = 0x4000, scoped, tag = 'output window, operand 0']
    #allocation4 [shape = 's32[2]{0}', space=sflag, size = 0x8, scoped, tag = 'scoped memory for tpu_custom_call.1']
    %10 = vsyncpa [#allocation4], 0
    %s11 = scalar_lea.sflag [#allocation4], 1
    %12 = vsyncpa %s11, 0
    loop: start=0, step=1, limit=4
    $region2: #{tpu_custom_call.1} parent=1 // loop_pre_header
      _
    $region3: #{tpu_custom_call.1} parent=1 // loop_header
      %s14 = sphi 0, %s18
      %p15 = scmp.ge.s32.totalorder %s14, 4
      %s24 = sphi 0, %s26
      %s27 = sphi 0, %s24
      %s28 = sphi 0, %s27
      %s44 = sphi 0, %s28
      %s48 = sphi 0, %s48
      %s50 = sphi 0, %s48
      %s51 = sphi 0, %s50
      %s65 = sphi 0, %s51
      %s69 = sphi 0, %s69
      %s71 = sphi 0, %s69
      %s72 = sphi 0, %s71
      %s86 = sphi 0, %s72
      %s90 = sphi 0, %s90
      %s92 = sphi 0, %s90
      %s93 = sphi 0, %s92
      %s107 = sphi 0, %s93
      %s111 = sphi 0, %s111
      %s113 = sphi 0, %s111
      %s114 = sphi 0, %s113
      %s128 = sphi 0, %s114
      %s134 = sphi 0, %s136
      %s137 = sphi 0, %s134
      %s138 = sphi 0, %s137
      %s154 = sphi 0, %s138
    $region4: #{tpu_custom_call.1} parent=1 // loop_header_branch
      %17 = sbr.rel (%p15) target = $region8
    $region5: #{tpu_custom_call.1} parent=1 // loop_body
      %s19 = ssub.s32 %s14, 1
      %s20 = ssub.s32 %s14, 2
      %s21 = sadd.s32 %s14, 1
      %s22 = ssub.s32 %s14, %s21
      %p23 = scmp.eq.s32.totalorder %s22, 0
      %s25 = sadd.s32 %s24, 1
      %s26 = scalar_select %p23, %s24, %s25
      %p29 = pneg %p23
      %p30 = scmp.eq.s32.totalorder %s14, 1
      %p31 = por %p29, %p30
      %p32 = scmp.ne.s32.totalorder %s24, %s27
      %p33 = scmp.eq.s32.totalorder %s14, 0
      %p34 = por %p32, %p33
      %p35 = scmp.ne.s32.totalorder %s24, %s27
      %p36 = scmp.eq.s32.totalorder %s19, 1
      %p37 = por %p35, %p36
      %p38 = scmp.ne.s32.totalorder %s27, %s28
      %p39 = scmp.eq.s32.totalorder %s19, 0
      %p40 = por %p38, %p39
      %p41 = scmp.ne.s32.totalorder %s27, %s28
      %p42 = scmp.eq.s32.totalorder %s20, 1
      %p43 = por %p41, %p42
      %p45 = scmp.ne.s32.totalorder %s28, %s44
      %p46 = scmp.eq.s32.totalorder %s20, 0
      %p47 = por %p45, %p46
      %s49 = sadd.s32 %s48, 1
      %p52 = scmp.eq.s32.totalorder %s14, 1
      %p53 = scmp.ne.s32.totalorder %s48, %s50
      %p54 = scmp.eq.s32.totalorder %s14, 0
      %p55 = por %p53, %p54
      %p56 = scmp.ne.s32.totalorder %s48, %s50
      %p57 = scmp.eq.s32.totalorder %s19, 1
      %p58 = por %p56, %p57
      %p59 = scmp.ne.s32.totalorder %s50, %s51
      %p60 = scmp.eq.s32.totalorder %s19, 0
      %p61 = por %p59, %p60
      %p62 = scmp.ne.s32.totalorder %s50, %s51
      %p63 = scmp.eq.s32.totalorder %s20, 1
      %p64 = por %p62, %p63
      %p66 = scmp.ne.s32.totalorder %s51, %s65
      %p67 = scmp.eq.s32.totalorder %s20, 0
      %p68 = por %p66, %p67
      %s70 = sadd.s32 %s69, 1
      %p73 = scmp.eq.s32.totalorder %s14, 1
      %p74 = scmp.ne.s32.totalorder %s69, %s71
      %p75 = scmp.eq.s32.totalorder %s14, 0
      %p76 = por %p74, %p75
      %p77 = scmp.ne.s32.totalorder %s69, %s71
      %p78 = scmp.eq.s32.totalorder %s19, 1
      %p79 = por %p77, %p78
      %p80 = scmp.ne.s32.totalorder %s71, %s72
      %p81 = scmp.eq.s32.totalorder %s19, 0
      %p82 = por %p80, %p81
      %p83 = scmp.ne.s32.totalorder %s71, %s72
      %p84 = scmp.eq.s32.totalorder %s20, 1
      %p85 = por %p83, %p84
      %p87 = scmp.ne.s32.totalorder %s72, %s86
      %p88 = scmp.eq.s32.totalorder %s20, 0
      %p89 = por %p87, %p88
      %s91 = sadd.s32 %s90, 1
      %p94 = scmp.eq.s32.totalorder %s14, 1
      %p95 = scmp.ne.s32.totalorder %s90, %s92
      %p96 = scmp.eq.s32.totalorder %s14, 0
      %p97 = por %p95, %p96
      %p98 = scmp.ne.s32.totalorder %s90, %s92
      %p99 = scmp.eq.s32.totalorder %s19, 1
      %p100 = por %p98, %p99
      %p101 = scmp.ne.s32.totalorder %s92, %s93
      %p102 = scmp.eq.s32.totalorder %s19, 0
      %p103 = por %p101, %p102
      %p104 = scmp.ne.s32.totalorder %s92, %s93
      %p105 = scmp.eq.s32.totalorder %s20, 1
      %p106 = por %p104, %p105
      %p108 = scmp.ne.s32.totalorder %s93, %s107
      %p109 = scmp.eq.s32.totalorder %s20, 0
      %p110 = por %p108, %p109
      %s112 = sadd.s32 %s111, 1
      %p115 = scmp.eq.s32.totalorder %s14, 1
      %p116 = scmp.ne.s32.totalorder %s111, %s113
      %p117 = scmp.eq.s32.totalorder %s14, 0
      %p118 = por %p116, %p117
      %p119 = scmp.ne.s32.totalorder %s111, %s113
      %p120 = scmp.eq.s32.totalorder %s19, 1
      %p121 = por %p119, %p120
      %p122 = scmp.ne.s32.totalorder %s113, %s114
      %p123 = scmp.eq.s32.totalorder %s19, 0
      %p124 = por %p122, %p123
      %p125 = scmp.ne.s32.totalorder %s113, %s114
      %p126 = scmp.eq.s32.totalorder %s20, 1
      %p127 = por %p125, %p126
      %p129 = scmp.ne.s32.totalorder %s114, %s128
      %p130 = scmp.eq.s32.totalorder %s20, 0
      %p131 = por %p129, %p130
      %s132 = ssub.s32 %s14, %s21
      %p133 = scmp.eq.s32.totalorder %s132, 0
      %s135 = sadd.s32 %s134, 1
      %s136 = scalar_select %p133, %s134, %s135
      %p139 = pneg %p133
      %p140 = scmp.eq.s32.totalorder %s14, 1
      %p141 = por %p139, %p140
      %p142 = scmp.ne.s32.totalorder %s134, %s137
      %p143 = scmp.eq.s32.totalorder %s14, 0
      %p144 = por %p142, %p143
      %p145 = scmp.ne.s32.totalorder %s134, %s137
      %p146 = scmp.eq.s32.totalorder %s19, 1
      %p147 = por %p145, %p146
      %p148 = scmp.ne.s32.totalorder %s137, %s138
      %p149 = scmp.eq.s32.totalorder %s19, 0
      %p150 = por %p148, %p149
      %p151 = scmp.ne.s32.totalorder %s137, %s138
      %p152 = scmp.eq.s32.totalorder %s20, 1
      %p153 = por %p151, %p152
      %p155 = scmp.ne.s32.totalorder %s138, %s154
      %p156 = scmp.eq.s32.totalorder %s20, 0
      %p157 = por %p155, %p156
      %p158 = scmp.le.s32.totalorder 1, %s14
      %p159 = scmp.lt.s32.totalorder %s14, 3
      %p160 = pnand %p158, %p159
      %p161 = pneg %p160
      // Predicated region
      $region9: #{tpu_custom_call.1} parent=5 // pred_check
        _
      $region10: #{tpu_custom_call.1} parent=5 // pred_check_branch
        %163 = sbr.rel (%p160) target = $region12
      $region11: #{tpu_custom_call.1} parent=5 // pred_region
        %s164 = ssub.s32 %s14, 1
        // Predicated region
        $region13: #{tpu_custom_call.1} parent=11 // pred_check
          %p165 = pneg %p61
        $region14: #{tpu_custom_call.1} parent=11 // pred_check_branch
          %167 = sbr.rel (%p165) target = $region16
        $region15: #{tpu_custom_call.1} parent=11 // pred_region
          _
        $region16: #{tpu_custom_call.1} parent=11 // pred_fallthru
          _
        // Predicated region
        $region17: #{tpu_custom_call.1} parent=11 // pred_check
          %p168 = pneg %p82
        $region18: #{tpu_custom_call.1} parent=11 // pred_check_branch
          %170 = sbr.rel (%p168) target = $region20
        $region19: #{tpu_custom_call.1} parent=11 // pred_region
          _
        $region20: #{tpu_custom_call.1} parent=11 // pred_fallthru
          _
        // Predicated region
        $region21: #{tpu_custom_call.1} parent=11 // pred_check
          %p171 = pneg %p103
        $region22: #{tpu_custom_call.1} parent=11 // pred_check_branch
          %173 = sbr.rel (%p171) target = $region24
        $region23: #{tpu_custom_call.1} parent=11 // pred_region
          _
        $region24: #{tpu_custom_call.1} parent=11 // pred_fallthru
          _
        // Predicated region
        $region25: #{tpu_custom_call.1} parent=11 // pred_check
          %p174 = pneg %p124
        $region26: #{tpu_custom_call.1} parent=11 // pred_check_branch
          %176 = sbr.rel (%p174) target = $region28
        $region27: #{tpu_custom_call.1} parent=11 // pred_region
          _
        $region28: #{tpu_custom_call.1} parent=11 // pred_fallthru
          _
      $region12: #{tpu_custom_call.1} parent=5 // pred_fallthru
        _
      %p177 = scmp.lt.s32.totalorder %s14, 2
      // Predicated region
      $region29: #{tpu_custom_call.1} parent=5 // pred_check
        %p178 = pneg %p177
      $region30: #{tpu_custom_call.1} parent=5 // pred_check_branch
        %180 = sbr.rel (%p178) target = $region32
      $region31: #{tpu_custom_call.1} parent=5 // pred_region
        // Predicated region
        $region33: #{tpu_custom_call.1} parent=31 // pred_check
          %p181 = pneg %p34
        $region34: #{tpu_custom_call.1} parent=31 // pred_check_branch
          %183 = sbr.rel (%p181) target = $region36
        $region35: #{tpu_custom_call.1} parent=31 // pred_region
          %p184 = scmp.lt.s32.totalorder %s14, 1
          %s185 = scalar_select %p184, %s14, 1
          %s186 = smul.addr %s185, 2
          %s187 = smul.addr %s186, 4
          %s188 = scalar_lea.vmem %s0, %s187
        $region36: #{tpu_custom_call.1} parent=31 // pred_fallthru
          _
      $region32: #{tpu_custom_call.1} parent=5 // pred_fallthru
        _
      %p189 = scmp.le.s32.totalorder 1, %s14
      %p190 = scmp.lt.s32.totalorder %s14, 3
      %p191 = pnand %p189, %p190
      %p192 = pneg %p191
      // Predicated region
      $region37: #{tpu_custom_call.1} parent=5 // pred_check
        _
      $region38: #{tpu_custom_call.1} parent=5 // pred_check_branch
        %194 = sbr.rel (%p191) target = $region40
      $region39: #{tpu_custom_call.1} parent=5 // pred_region
        %s195 = ssub.s32 %s14, 1
        %p196 = scmp.lt.s32.totalorder %s19, 1
        %s197 = scalar_select %p196, %s19, 1
        %s198 = smul.addr %s197, 2
        %s199 = smul.addr %s198, 4
        %s200 = scalar_lea.vmem %s0, %s199
        %p201 = pneg %p40
        %p202 = pneg %p37
        %p203 = pneg %p61
        %p204 = pneg %p58
        %p205 = pneg %p82
        %p206 = pneg %p79
        %p207 = pneg %p103
        %p208 = pneg %p100
        %p209 = pneg %p124
        %p210 = pneg %p121
        %p211 = pneg %p150
        %p212 = pneg %p147
        %s213 = sand.u32 %s137, 1
        %s214 = scalar_lea.sflag [#allocation4], %s213
        %s215 = sand.u32 %s137, 1
        %s216 = smul.addr %s215, 16
        %s217 = scalar_lea.vmem [#allocation3], %s216
        %p218 = scmp.lt.s32.totalorder %s19, 1
        %s219 = scalar_select %p218, %s19, 1
        %s220 = smul.addr %s219, 2
        %s221 = smul.addr %s220, 4
        %s222 = scalar_lea.vmem %s0, %s221
        %223 = vst [vmem:[#allocation2] sm:$0xf] 0.0
        %224 = vst [vmem:[#allocation2 + $0xc] sm:$0xf] 0.0
        %v225 = vld [vmem:[%s222] sm:$0xff]
        %226 = vst [vmem:[#allocation2 + $0x4] sm:$0xff] %v225
        %v227 = vlaneseq
        %v228 = vand.u32 %v227, 127
        %v229 = vadd.s32 %v228, 128
        %vm230 = vcmp.lt.s32.totalorder %v228, 0
        %v231 = vsub.s32 0, %v228
        %v232 = vsel %vm230, %v231, %v228
        %v233 = vshrl.u32 %v232, 4
        %v234 = vand.u32 %v232, 15
        %v235 = vsub.s32 0, %v234
        %v236 = vsel %vm230, %v235, %v234
        %vm237 = vcmp.lt.s32.totalorder %v229, 0
        %v238 = vsub.s32 0, %v229
        %v239 = vsel %vm237, %v238, %v229
        %v240 = vshrl.u32 %v239, 4
        %v241 = vand.u32 %v239, 15
        %v242 = vsub.s32 0, %v241
        %v243 = vsel %vm237, %v242, %v241
        %vm244 = vcmp.ne.s32.totalorder %v236, 0
        %vm245 = vcmp.ne.s32.totalorder %v243, 0
        %vm246 = vcmp.lt.s32.totalorder %v236, 0
        %vm247 = vcmp.lt.s32.totalorder %v243, 0
        %vm248 = vmand %vm246, %vm244
        %vm249 = vmand %vm247, %vm245
        %v250 = vadd.s32 %v236, 16
        %v251 = vadd.s32 %v243, 16
        %v252 = vsel %vm248, %v250, %v236
        %v253 = vsel %vm249, %v251, %v243
        %vm254 = vcmp.ge.s32.totalorder %v252, 1
        %vm255 = vcmp.ge.s32.totalorder %v253, 1
        %vm256 = vcmp.lt.s32.totalorder %v252, 15
        %vm257 = vcmp.lt.s32.totalorder %v253, 15
        %v258 = vld [vmem:[%s1] sm:$0xf]
        %v259 = vld [vmem:[#allocation2] sm:$0xff]
        %v260 = vld [vmem:[#allocation2 + $0x8] sm:$0xf]
        %v263 = vcombine.high %v259, %v259
        %264 = vrot.lane.b32.xlu0 %v259, 16
        %v265 = vpop.permute.xlu0 %264
        %266 = vrot.lane.b32.xlu0 %v263, 16
        %v267 = vpop.permute.xlu0 %266
        %268 = vrot.lane.b32.xlu0 %v260, 16
        %v269 = vpop.permute.xlu0 %268
        %vm270 = vcmask 130048
        %v271 = vsel %vm270, %v265, %v267
        %v272 = vsel %vm270, %v267, %v269
        %275 = vrot.lane.b32.xlu0 %v271, 1
        %v276 = vpop.permute.xlu0 %275
        %277 = vrot.lane.b32.xlu0 %v272, 1
        %v278 = vpop.permute.xlu0 %277
        %vm279 = vcmp.lt.s32.totalorder %v228, 1
        %v280 = vsel %vm279, %v276, %v278
        %v281 = vsel %vm279, %v278, %v276
        %v282 = vsel %vm254, 1, 0
        %v283 = vsel %vm255, 1, 0
        %vm284 = vcmp.eq.s32.totalorder %v282, 1
        %vm285 = vcmp.eq.s32.totalorder %v283, 1
        %v286 = vsel %vm284, %v281, 0.0
        %v287 = vsel %vm285, %v280, 0.0
        %289 = vset.pattern.permute.xlu0 0
        %290 = vperm.xlu0 %289, %v258
        %v291 = vpop.permute.xlu0 %290
        %v293 = vmul.f32 %v286, %v291
        %v294 = vmul.f32 %v287, %v291
        %v295 = vadd.f32 %v293, 0.0
        %v296 = vadd.f32 %v294, 0.0
        %297 = vset.pattern.permute.xlu0 1
        %298 = vperm.xlu0 %297, %v258
        %v299 = vpop.permute.xlu0 %298
        %v301 = vunpack.c.l.s4 839922192
        %v302 = vunpack.c.0.s8 %v301
        %v303 = vlaneseq
        %v304 = vshrl.u32 %v303, 7
        %v305 = vsub.s32 %v302, %v304
        %v306 = vrot.slane %v299, %v305
        %v308 = vmul.f32 %v259, %v306
        %v309 = vmul.f32 %v260, %v306
        %v312 = vcombine.high %v308, %v308
        %313 = vrot.lane.b32.xlu0 %v308, 16
        %v314 = vpop.permute.xlu0 %313
        %315 = vrot.lane.b32.xlu0 %v312, 16
        %v316 = vpop.permute.xlu0 %315
        %317 = vrot.lane.b32.xlu0 %v309, 16
        %v318 = vpop.permute.xlu0 %317
        %v319 = vsel %vm270, %v314, %v316
        %v320 = vsel %vm270, %v316, %v318
        %v323 = vadd.f32 %v295, %v319
        %v324 = vadd.f32 %v296, %v320
        %325 = vrot.lane.b32.xlu0 %v271, 127
        %v326 = vpop.permute.xlu0 %325
        %327 = vrot.lane.b32.xlu0 %v272, 127
        %v328 = vpop.permute.xlu0 %327
        %vm329 = vcmp.lt.s32.totalorder %v228, 127
        %v330 = vsel %vm329, %v326, %v328
        %v331 = vsel %vm329, %v328, %v326
        %v332 = vsel %vm256, 1, 0
        %v333 = vsel %vm257, 1, 0
        %vm334 = vcmp.eq.s32.totalorder %v332, 1
        %vm335 = vcmp.eq.s32.totalorder %v333, 1
        %v336 = vsel %vm334, %v330, 0.0
        %v337 = vsel %vm335, %v331, 0.0
        %338 = vset.pattern.permute.xlu0 2
        %339 = vperm.xlu0 %338, %v258
        %v340 = vpop.permute.xlu0 %339
        %v342 = vmul.f32 %v336, %v340
        %v343 = vmul.f32 %v337, %v340
        %v344 = vadd.f32 %v323, %v342
        %v345 = vadd.f32 %v324, %v343
        %v346 = vld [vmem:[#allocation2 + $0x4] sm:$0xff]
        %v348 = vcombine.high %v346, %v346
        %350 = vrot.lane.b32.xlu0 %v346, 1
        %v351 = vpop.permute.xlu0 %350
        %352 = vrot.lane.b32.xlu0 %v348, 1
        %v353 = vpop.permute.xlu0 %352
        %v354 = vsel %vm279, %v351, %v353
        %v355 = vsel %vm279, %v353, %v351
        %v356 = vsel %vm284, %v355, 0.0
        %v357 = vsel %vm285, %v354, 0.0
        %358 = vset.pattern.permute.xlu0 3
        %359 = vperm.xlu0 %358, %v258
        %v360 = vpop.permute.xlu0 %359
        %v362 = vmul.f32 %v356, %v360
        %v363 = vmul.f32 %v357, %v360
        %v364 = vadd.f32 %v344, %v362
        %v365 = vadd.f32 %v345, %v363
        %366 = vset.pattern.permute.xlu0 4
        %367 = vperm.xlu0 %366, %v258
        %v368 = vpop.permute.xlu0 %367
        %v370 = vunpack.c.l.s4 839922192
        %v371 = vunpack.c.0.s8 %v370
        %v372 = vlaneseq
        %v373 = vshrl.u32 %v372, 7
        %v374 = vsub.s32 %v371, %v373
        %v375 = vrot.slane %v368, %v374
        %v377 = vmul.f32 %v346, %v375
        %v379 = vcombine.high %v377, %v377
        %v381 = vadd.f32 %v364, %v377
        %v382 = vadd.f32 %v365, %v379
        %383 = vrot.lane.b32.xlu0 %v346, 127
        %v384 = vpop.permute.xlu0 %383
        %385 = vrot.lane.b32.xlu0 %v348, 127
        %v386 = vpop.permute.xlu0 %385
        %v387 = vsel %vm329, %v384, %v386
        %v388 = vsel %vm329, %v386, %v384
        %v389 = vsel %vm334, %v387, 0.0
        %v390 = vsel %vm335, %v388, 0.0
        %391 = vset.pattern.permute.xlu0 5
        %392 = vperm.xlu0 %391, %v258
        %v393 = vpop.permute.xlu0 %392
        %v395 = vmul.f32 %v389, %v393
        %v396 = vmul.f32 %v390, %v393
        %v397 = vadd.f32 %v381, %v395
        %v398 = vadd.f32 %v382, %v396
        %v399 = vld [vmem:[#allocation2 + $0x4] sm:$0xff]
        %v400 = vld [vmem:[#allocation2 + $0xc] sm:$0xf]
        %v403 = vcombine.high %v399, %v399
        %404 = vrot.lane.b32.xlu0 %v399, 112
        %v405 = vpop.permute.xlu0 %404
        %406 = vrot.lane.b32.xlu0 %v403, 112
        %v407 = vpop.permute.xlu0 %406
        %408 = vrot.lane.b32.xlu0 %v400, 112
        %v409 = vpop.permute.xlu0 %408
        %vm410 = vcmask 916480
        %v411 = vsel %vm410, %v405, %v407
        %v412 = vsel %vm410, %v407, %v409
        %415 = vrot.lane.b32.xlu0 %v411, 1
        %v416 = vpop.permute.xlu0 %415
        %417 = vrot.lane.b32.xlu0 %v412, 1
        %v418 = vpop.permute.xlu0 %417
        %v419 = vsel %vm279, %v416, %v418
        %v420 = vsel %vm279, %v418, %v416
        %v421 = vsel %vm284, %v420, 0.0
        %v422 = vsel %vm285, %v419, 0.0
        %423 = vset.pattern.permute.xlu0 6
        %424 = vperm.xlu0 %423, %v258
        %v425 = vpop.permute.xlu0 %424
        %v427 = vmul.f32 %v421, %v425
        %v428 = vmul.f32 %v422, %v425
        %v429 = vadd.f32 %v397, %v427
        %v430 = vadd.f32 %v398, %v428
        %431 = vset.pattern.permute.xlu0 7
        %432 = vperm.xlu0 %431, %v258
        %v433 = vpop.permute.xlu0 %432
        %v435 = vunpack.c.l.s4 839922192
        %v436 = vunpack.c.0.s8 %v435
        %v437 = vlaneseq
        %v438 = vshrl.u32 %v437, 7
        %v439 = vsub.s32 %v436, %v438
        %v440 = vrot.slane %v433, %v439
        %v442 = vmul.f32 %v399, %v440
        %v443 = vmul.f32 %v400, %v440
        %v446 = vcombine.high %v442, %v442
        %447 = vrot.lane.b32.xlu0 %v442, 112
        %v448 = vpop.permute.xlu0 %447
        %449 = vrot.lane.b32.xlu0 %v446, 112
        %v450 = vpop.permute.xlu0 %449
        %451 = vrot.lane.b32.xlu0 %v443, 112
        %v452 = vpop.permute.xlu0 %451
        %v453 = vsel %vm410, %v448, %v450
        %v454 = vsel %vm410, %v450, %v452
        %v457 = vadd.f32 %v429, %v453
        %v458 = vadd.f32 %v430, %v454
        %459 = vrot.lane.b32.xlu0 %v411, 127
        %v460 = vpop.permute.xlu0 %459
        %461 = vrot.lane.b32.xlu0 %v412, 127
        %v462 = vpop.permute.xlu0 %461
        %v463 = vsel %vm329, %v460, %v462
        %v464 = vsel %vm329, %v462, %v460
        %v465 = vsel %vm334, %v463, 0.0
        %v466 = vsel %vm335, %v464, 0.0
        %467 = vset.pattern.permute.xlu0 8
        %468 = vperm.xlu0 %467, %v258
        %v469 = vpop.permute.xlu0 %468
        %v471 = vmul.f32 %v465, %v469
        %v472 = vmul.f32 %v466, %v469
        %v473 = vadd.f32 %v457, %v471
        %v474 = vadd.f32 %v458, %v472
        %v475 = vld [vmem:[%s2] sm:$0xf]
        %477 = vset.pattern.permute.xlu0 0
        %478 = vperm.xlu0 %477, %v475
        %v479 = vpop.permute.xlu0 %478
        %v481 = vadd.f32 %v473, %v479
        %v482 = vadd.f32 %v474, %v479
        %v483 = vmax.f32 %v481, 0.0
        %v484 = vmax.f32 %v482, 0.0
        %v485 = vld [vmem:[%s3] sm:$0xff]
        %v486 = vld [vmem:[%s4] sm:$0xff]
        %488 = vset.pattern.permute.xlu0 0
        %489 = vperm.xlu0 %488, %v485
        %v490 = vpop.permute.xlu0 %489
        %v492 = vlaneseq
        %v493 = vshrl.u32 %v492, 7
        %v494 = vsub.s32 0, %v493
        %v495 = vrot.slane %v483, %v494
        %v496 = vlaneseq
        %v497 = vshrl.u32 %v496, 7
        %v498 = vsub.s32 0, %v497
        %v499 = vrot.slane %v484, %v498
        %v500 = vmul.f32 %v490, %v495
        %v501 = vmul.f32 %v490, %v499
        %v502 = vadd.f32 %v500, 0.0
        %v503 = vadd.f32 %v501, 0.0
        %504 = vset.pattern.permute.xlu0 1
        %505 = vperm.xlu0 %504, %v485
        %v506 = vpop.permute.xlu0 %505
        %v508 = vlaneseq
        %v509 = vshrl.u32 %v508, 7
        %v510 = vsub.s32 1, %v509
        %v511 = vrot.slane %v483, %v510
        %v512 = vlaneseq
        %v513 = vshrl.u32 %v512, 7
        %v514 = vsub.s32 1, %v513
        %v515 = vrot.slane %v484, %v514
        %v516 = vmul.f32 %v506, %v511
        %v517 = vmul.f32 %v506, %v515
        %v518 = vadd.f32 %v502, %v516
        %v519 = vadd.f32 %v503, %v517
        %520 = vset.pattern.permute.xlu0 2
        %521 = vperm.xlu0 %520, %v485
        %v522 = vpop.permute.xlu0 %521
        %v524 = vlaneseq
        %v525 = vshrl.u32 %v524, 7
        %v526 = vsub.s32 2, %v525
        %v527 = vrot.slane %v483, %v526
        %v528 = vlaneseq
        %v529 = vshrl.u32 %v528, 7
        %v530 = vsub.s32 2, %v529
        %v531 = vrot.slane %v484, %v530
        %v532 = vmul.f32 %v522, %v527
        %v533 = vmul.f32 %v522, %v531
        %v534 = vadd.f32 %v518, %v532
        %v535 = vadd.f32 %v519, %v533
        %536 = vset.pattern.permute.xlu0 3
        %537 = vperm.xlu0 %536, %v485
        %v538 = vpop.permute.xlu0 %537
        %v540 = vlaneseq
        %v541 = vshrl.u32 %v540, 7
        %v542 = vsub.s32 3, %v541
        %v543 = vrot.slane %v483, %v542
        %v544 = vlaneseq
        %v545 = vshrl.u32 %v544, 7
        %v546 = vsub.s32 3, %v545
        %v547 = vrot.slane %v484, %v546
        %v548 = vmul.f32 %v538, %v543
        %v549 = vmul.f32 %v538, %v547
        %v550 = vadd.f32 %v534, %v548
        %v551 = vadd.f32 %v535, %v549
        %553 = vset.pattern.permute.xlu0 0
        %554 = vperm.xlu0 %553, %v486
        %v555 = vpop.permute.xlu0 %554
        %v557 = vadd.f32 %v550, %v555
        %v558 = vadd.f32 %v551, %v555
        %v559 = vmax.f32 %v557, 0.0
        %v560 = vmax.f32 %v558, 0.0
        %561 = vst [vmem:[%s217] sm:$0xff] %v559
        %562 = vst [vmem:[%s217 + $0x8] sm:$0xff] %v560
        %s563 = sand.u32 %s137, 1
        %s564 = scalar_lea.sflag [#allocation4], %s563
        %s565 = sand.u32 %s137, 1
        %s566 = smul.addr %s565, 16
        %s567 = scalar_lea.vmem [#allocation3], %s566
        // Predicated region
        $region41: #{tpu_custom_call.1} parent=39 // pred_check
          %p568 = pneg %p147
        $region42: #{tpu_custom_call.1} parent=39 // pred_check_branch
          %570 = sbr.rel (%p568) target = $region44
        $region43: #{tpu_custom_call.1} parent=39 // pred_region
          %s572 = ssub.s32 256, 256
          %573 = vsyncadd %s564, %s572
          %s574 = smul.addr %s19, 2
          %s575 = smul.addr %s574, 128
          %s576 = scalar_lea.hbm %s5, %s575
          %s578 = sshll.u32 %s567, 4
          %s579 = int_to_ptr.vmem [resolvable:$true] %s578
          %581 = dma.vmem_to_hbm [thread:$0]  %s579, 256, %s576, %s564
        $region44: #{tpu_custom_call.1} parent=39 // pred_fallthru
          _
      $region40: #{tpu_custom_call.1} parent=5 // pred_fallthru
        _
      %p582 = scmp.le.s32.totalorder 2, %s14
      // Predicated region
      $region45: #{tpu_custom_call.1} parent=5 // pred_check
        %p583 = pneg %p582
      $region46: #{tpu_custom_call.1} parent=5 // pred_check_branch
        %585 = sbr.rel (%p583) target = $region48
      $region47: #{tpu_custom_call.1} parent=5 // pred_region
        %s586 = ssub.s32 %s14, 2
        // Predicated region
        $region49: #{tpu_custom_call.1} parent=47 // pred_check
          %p587 = pneg %p153
        $region50: #{tpu_custom_call.1} parent=47 // pred_check_branch
          %589 = sbr.rel (%p587) target = $region52
        $region51: #{tpu_custom_call.1} parent=47 // pred_region
          %s590 = sand.u32 %s138, 1
          %s591 = scalar_lea.sflag [#allocation4], %s590
          %s592 = sand.u32 %s138, 1
          %s593 = smul.addr %s592, 16
          %s594 = scalar_lea.vmem [#allocation3], %s593
          %595 = dma.done %s591, 256
        $region52: #{tpu_custom_call.1} parent=47 // pred_fallthru
          _
      $region48: #{tpu_custom_call.1} parent=5 // pred_fallthru
        _
    $region6: #{tpu_custom_call.1} parent=1 // loop_footer
      %s18 = sadd.s32 1, %s14
    $region7: #{tpu_custom_call.1} parent=1 // loop_footer_branch
      %13 = sbr.rel target = $region3
    $region8: #{tpu_custom_call.1} parent=1 // loop_exit
      _
    %596 = vsyncpa [#allocation4], 1
    %s597 = scalar_lea.sflag [#allocation4], 1
    %598 = vsyncpa %s597, 1

</llo_original>
